<compile_context>
chip_gen: v6e
topology: v6e:2x2x1
jax: 0.10.0
libtpu: 0.0.40
codegen_flags: <defaults>
</compile_context>

<pallas_src>
import jax
import jax.numpy as jnp
from jax.experimental import pallas as pl
from jax.experimental.pallas import tpu as pltpu


def _round_up(x, m):
    return (x + m - 1) // m * m


def _vmem_capacity_bytes():
    """Physical per-core VMEM, with a v7x-safe fallback."""
    try:
        cap = int(pltpu.get_tpu_info().vmem_capacity_bytes)
        if cap > 0:
            return cap
    except Exception:
        pass
    return 64 << 20  # v7x per-TensorCore size == safe lower bound everywhere


def _softdot_body(h_ref, ctx_ref, bias_ref, w_in_t_ref, w_a_t_ref, w_b_t_ref,
                  out_ref, attn_ref):
    f32 = jnp.float32
    # Stream in native dtype; upcast in-register, accumulate matmuls in f32.
    h = h_ref[...].astype(f32)          # (TB, D)
    ctx = ctx_ref[...].astype(f32)      # (TB, S, D)

    # target = linear_in(h); weight pre-transposed to (in, out) on the host.
    target = jnp.dot(h, w_in_t_ref[...].astype(f32),
                     preferred_element_type=f32)                    # (TB, D)

    # logits[b, s] = sum_d target[b, d] * ctx[b, s, d]
    # VPU broadcast-multiply + lane reduce (no per-batch M=1 MXU matmuls).
    logits = jnp.sum(target[:, None, :] * ctx, axis=-1)             # (TB, S)
    if bias_ref is not None:
        logits = logits + bias_ref[...]        # -1e30 on user-masked positions

    # softmax over the sequence dim (exact divide: parity with torch.softmax).
    m = jnp.max(logits, axis=-1, keepdims=True)
    e = jnp.exp(logits - m)
    attn = e / jnp.sum(e, axis=-1, keepdims=True)
    attn_ref[...] = attn.astype(attn_ref.dtype)

    # weighted_context[b, d] = sum_s attn[b, s] * ctx[b, s, d]
    weighted = jnp.sum(attn[:, :, None] * ctx, axis=1)              # (TB, D)

    # linear_out(cat(weighted, h)) == weighted @ W_a^T + h @ W_b^T
    pre = (jnp.dot(weighted, w_a_t_ref[...].astype(f32),
                   preferred_element_type=f32)
           + jnp.dot(h, w_b_t_ref[...].astype(f32),
                     preferred_element_type=f32))
    out_ref[...] = jnp.tanh(pre).astype(out_ref.dtype)


def _kernel_masked(h_ref, ctx_ref, bias_ref, w_in_t_ref, w_a_t_ref, w_b_t_ref,
                   out_ref, attn_ref):
    _softdot_body(h_ref, ctx_ref, bias_ref, w_in_t_ref, w_a_t_ref, w_b_t_ref,
                  out_ref, attn_ref)


def _kernel_unmasked(h_ref, ctx_ref, w_in_t_ref, w_a_t_ref, w_b_t_ref,
                     out_ref, attn_ref):
    _softdot_body(h_ref, ctx_ref, None, w_in_t_ref, w_a_t_ref, w_b_t_ref,
                  out_ref, attn_ref)


def _choose_batch_tile(B, S, D, ctx_itemsize, capacity):
    """Batch tile sized so the double-buffered ctx block uses ~half of VMEM."""
    ctx_budget = capacity // 2
    per_row = 2 * S * D * ctx_itemsize            # double-buffered bytes / row
    tb_fit = (ctx_budget // max(per_row, 1)) // 8 * 8
    tb_fit = int(max(8, min(tb_fit, 1024)))
    if B <= tb_fit:
        # Whole batch fits in one block. If it is large, split into two grid
        # steps so dimension_semantics=("parallel",) can shard across the two
        # v7x TensorCores instead of leaving one idle.
        half = _round_up((B + 1) // 2, 8)
        if B >= 256 and half <= tb_fit:
            return half
        return B
    if tb_fit < 128:
        # TODO(synk): for very large S*D a flash-style online softmax over an
        # S grid axis (m/l/acc scratch + attn renormalization) would keep the
        # MXU M-dim >= 128; with full-S blocks the batch tile must shrink.
        pass
    return tb_fit


def soft_dot_attention(h, context, w_in, w_out, mask=None):
    """SoftDotAttention forward.

    h       : (B, D)      query
    context : (B, S, D)   context vectors
    w_in    : (D, D)      linear_in weight, PyTorch (out, in) layout
    w_out   : (D, 2*D)    linear_out weight, PyTorch (out, in) layout
    mask    : optional (B, S) bool, True = position masked out (as in PyTorch)
    returns (lang_embeds (B, D), attn (B, S))
    """
    h = jnp.asarray(h)
    context = jnp.asarray(context)
    w_in = jnp.asarray(w_in)
    w_out = jnp.asarray(w_out)

    B, D = h.shape
    _, S, _ = context.shape
    assert context.shape == (B, S, D)
    assert w_in.shape == (D, D) and w_out.shape == (D, 2 * D)
    out_dtype = h.dtype

    # Weights pre-transposed to (in, out); linear_out pre-split at column D so
    # the kernel never concatenates or slices along the lane dim.
    w_in_t = w_in.T                 # (D, D)
    w_a_t = w_out[:, :D].T          # (D, D), applied to weighted_context
    w_b_t = w_out[:, D:].T          # (D, D), applied to h

    # Optional user mask streamed at its original (B, S) size as an additive
    # bias (exp underflow -> exactly zero attention on masked positions).
    bias = None
    if mask is not None:
        bias = jnp.where(jnp.asarray(mask, dtype=bool),
                         jnp.float32(-1e30), jnp.float32(0.0))

    capacity = _vmem_capacity_bytes()
    ctx_itemsize = jnp.dtype(context.dtype).itemsize
    TB = _choose_batch_tile(B, S, D, ctx_itemsize, capacity)
    grid = (pl.cdiv(B, TB),)

    # VMEM requirement (weights counted double-buffered so the fallback path
    # below also fits) + headroom; never clamp below the actual need.
    w_bytes = 3 * D * D * jnp.dtype(w_in.dtype).itemsize
    need = (2 * TB * S * D * ctx_itemsize
            + 2 * TB * D * jnp.dtype(h.dtype).itemsize
            + 2 * TB * D * jnp.dtype(out_dtype).itemsize
            + 2 * TB * S * jnp.dtype(out_dtype).itemsize
            + 2 * w_bytes
            + (2 * TB * S * 4 if bias is not None else 0))
    vmem_limit = int(min(int(capacity * 0.9), max(2 * need, 32 << 20)))
    vmem_limit = int(min(max(vmem_limit, need + (4 << 20)), capacity))

    # Advisory cost estimate for the XLA scheduler.
    flops = int(B * (2 * D * D + 2 * S * D + 2 * S * D + 4 * D * D))
    transcendentals = int(B * (S + D))
    bytes_accessed = int(B * S * D * ctx_itemsize
                         + 2 * B * D * jnp.dtype(h.dtype).itemsize
                         + 2 * B * S * 4
                         + 3 * D * D * jnp.dtype(w_in.dtype).itemsize)
    cost = pl.CostEstimate(flops=flops, transcendentals=transcendentals,
                           bytes_accessed=bytes_accessed)

    def _call(single_buffer_weights):
        def w_spec():
            if single_buffer_weights:
                # Grid-invariant operand: double-buffering is pure VMEM waste.
                return pl.BlockSpec((D, D), lambda i: (0, 0),
                                    pipeline_mode=pl.Buffered(1))
            return pl.BlockSpec((D, D), lambda i: (0, 0))

        in_specs = [pl.BlockSpec((TB, D), lambda i: (i, 0)),           # h
                    pl.BlockSpec((TB, S, D), lambda i: (i, 0, 0))]     # context
        args = [h, context]
        if bias is not None:
            in_specs.append(pl.BlockSpec((TB, S), lambda i: (i, 0)))   # mask bias
            args.append(bias)
        in_specs += [w_spec(), w_spec(), w_spec()]
        args += [w_in_t, w_a_t, w_b_t]

        kernel = _kernel_masked if bias is not None else _kernel_unmasked
        return pl.pallas_call(
            kernel,
            out_shape=(jax.ShapeDtypeStruct((B, D), out_dtype),   # lang_embeds
                       jax.ShapeDtypeStruct((B, S), out_dtype)),  # attn
            grid_spec=pltpu.PrefetchScalarGridSpec(
                num_scalar_prefetch=0,
                grid=grid,
                in_specs=in_specs,
                out_specs=(pl.BlockSpec((TB, D), lambda i: (i, 0)),
                           pl.BlockSpec((TB, S), lambda i: (i, 0)))),
            compiler_params=pltpu.CompilerParams(
                dimension_semantics=("parallel",),
                vmem_limit_bytes=vmem_limit),
            cost_estimate=cost,
        )(*args)

    try:
        return _call(True)
    except Exception:
        # Fallback for JAX versions that reject single-buffering grid-invariant
        # operands via pl.Buffered(1): default double-buffered weight blocks
        # (the VMEM budget above already accounts for them).
        return _call(False)


def _reference(h, context, w_in, w_out, mask=None):
    target = h @ w_in.T
    logits = jnp.einsum('bsd,bd->bs', context, target)
    if mask is not None:
        logits = jnp.where(mask, -jnp.inf, logits)
    attn = jax.nn.softmax(logits, axis=1)
    weighted = jnp.einsum('bs,bsd->bd', attn, context)
    cat = jnp.concatenate([weighted, h], axis=1)
    return jnp.tanh(cat @ w_out.T), attn


if __name__ == "__main__":
    B, S, D = 2, 8, 32

    key = jax.random.PRNGKey(0)
    k_h, k_ctx, k_win, k_wout = jax.random.split(key, 4)

    h = jax.random.normal(k_h, (B, D), dtype=jnp.float32)
    context = jax.random.normal(k_ctx, (B, S, D), dtype=jnp.float32)
    # Deterministic synthetic parameters in PyTorch (out, in) layout.
    w_in = jax.random.normal(k_win, (D, D), dtype=jnp.float32) * 0.1
    w_out = jax.random.normal(k_wout, (D, 2 * D), dtype=jnp.float32) * 0.1

    # unmasked path
    lang_embeds, attn = soft_dot_attention(h, context, w_in, w_out)
    jax.block_until_ready((lang_embeds, attn))
    ref_le, ref_attn = _reference(h, context, w_in, w_out)
    assert lang_embeds.shape == (B, D) and attn.shape == (B, S)
    assert jnp.allclose(lang_embeds, ref_le, atol=1e-4, rtol=1e-4), "lang_embeds mismatch"
    assert jnp.allclose(attn, ref_attn, atol=1e-4, rtol=1e-4), "attn mismatch"

    # masked path (mask out the last 3 sequence positions of every row)
    mask = jnp.broadcast_to(jnp.arange(S)[None, :] >= (S - 3), (B, S))
    lang_embeds_m, attn_m = soft_dot_attention(h, context, w_in, w_out, mask=mask)
    jax.block_until_ready((lang_embeds_m, attn_m))
    ref_le_m, ref_attn_m = _reference(h, context, w_in, w_out, mask=mask)
    assert jnp.allclose(lang_embeds_m, ref_le_m, atol=1e-4, rtol=1e-4), "masked lang_embeds mismatch"
    assert jnp.allclose(attn_m, ref_attn_m, atol=1e-4, rtol=1e-4), "masked attn mismatch"
    assert jnp.all(attn_m[:, S - 3:] == 0.0), "masked positions should have zero attention"

    print("KERNEL_OK")
</pallas_src>

<mosaic_0001>
module attributes {stable_mosaic.version = 11 : i64} {
  func.func @_kernel_unmasked(%arg0: i32, %arg1: memref<2x32xf32, #tpu.memory_space<vmem>>, %arg2: memref<2x8x32xf32, #tpu.memory_space<vmem>>, %arg3: memref<32x32xf32, #tpu.memory_space<vmem>>, %arg4: memref<32x32xf32, #tpu.memory_space<vmem>>, %arg5: memref<32x32xf32, #tpu.memory_space<vmem>>, %arg6: memref<2x32xf32, #tpu.memory_space<vmem>>, %arg7: memref<2x8xf32, #tpu.memory_space<vmem>>) attributes {dimension_semantics = [#tpu.dimension_semantics<parallel>], iteration_bounds = array<i64: 1>, scalar_prefetch = 0 : i64, scratch_operands = 0 : i64, tpu.core_type = #tpu.core_type<tc>, window_params = [{transform_indices = @transform_0, window_bounds = array<i64: 2, 32>}, {transform_indices = @transform_1, window_bounds = array<i64: 2, 8, 32>}, {pipeline_mode = #tpu.pipeline_mode<synchronous>, transform_indices = @transform_2, window_bounds = array<i64: 32, 32>}, {pipeline_mode = #tpu.pipeline_mode<synchronous>, transform_indices = @transform_3, window_bounds = array<i64: 32, 32>}, {pipeline_mode = #tpu.pipeline_mode<synchronous>, transform_indices = @transform_4, window_bounds = array<i64: 32, 32>}, {transform_indices = @transform_5, window_bounds = array<i64: 2, 32>}, {transform_indices = @transform_6, window_bounds = array<i64: 2, 8>}]} {
    %c0 = arith.constant 0 : index
    %c0_0 = arith.constant 0 : index
    %0 = vector.load %arg1[%c0, %c0_0] : memref<2x32xf32, #tpu.memory_space<vmem>>, vector<2x32xf32>
    %c0_1 = arith.constant 0 : index
    %c0_2 = arith.constant 0 : index
    %c0_3 = arith.constant 0 : index
    %1 = vector.load %arg2[%c0_1, %c0_2, %c0_3] : memref<2x8x32xf32, #tpu.memory_space<vmem>>, vector<2x8x32xf32>
    %c0_4 = arith.constant 0 : index
    %c0_5 = arith.constant 0 : index
    %2 = vector.load %arg3[%c0_4, %c0_5] : memref<32x32xf32, #tpu.memory_space<vmem>>, vector<32x32xf32>
    %cst = arith.constant dense<0.000000e+00> : vector<2x32xf32>
    %3 = tpu.matmul %0, %2, %cst {dimension_numbers = #tpu.dot_dimension_numbers<[1], [0], [0], [1], [0, 0, 1, 1], [], []>} : vector<2x32xf32>, vector<32x32xf32>, vector<2x32xf32> -> vector<2x32xf32>
    %4 = vector.shape_cast %3 : vector<2x32xf32> to vector<2x1x32xf32>
    %5 = vector.broadcast %4 : vector<2x1x32xf32> to vector<2x8x32xf32>
    %6 = arith.mulf %5, %1 : vector<2x8x32xf32>
    %cst_6 = arith.constant dense<0.000000e+00> : vector<2x8xf32>
    %7 = vector.multi_reduction <add>, %6, %cst_6 [2] : vector<2x8x32xf32> to vector<2x8xf32>
    %cst_7 = arith.constant dense<0xFF800000> : vector<2xf32>
    %8 = vector.multi_reduction <maximumf>, %7, %cst_7 [1] : vector<2x8xf32> to vector<2xf32>
    %9 = vector.shape_cast %8 : vector<2xf32> to vector<2x1xf32>
    %10 = vector.broadcast %9 : vector<2x1xf32> to vector<2x8xf32>
    %11 = arith.subf %7, %10 : vector<2x8xf32>
    %12 = math.exp %11 : vector<2x8xf32>
    %cst_8 = arith.constant dense<0.000000e+00> : vector<2xf32>
    %13 = vector.multi_reduction <add>, %12, %cst_8 [1] : vector<2x8xf32> to vector<2xf32>
    %14 = vector.shape_cast %13 : vector<2xf32> to vector<2x1xf32>
    %15 = vector.broadcast %14 : vector<2x1xf32> to vector<2x8xf32>
    %16 = arith.divf %12, %15 : vector<2x8xf32>
    %c0_9 = arith.constant 0 : index
    %c0_10 = arith.constant 0 : index
    %17 = vector.load %arg7[%c0_9, %c0_10] : memref<2x8xf32, #tpu.memory_space<vmem>>, vector<2x8xf32>
    tpu.vector_store %arg7[%c0_9, %c0_10], %16 {strides = array<i32>} : memref<2x8xf32, #tpu.memory_space<vmem>>, vector<2x8xf32>,
    %18 = vector.shape_cast %16 : vector<2x8xf32> to vector<2x8x1xf32>
    %19 = vector.broadcast %18 : vector<2x8x1xf32> to vector<2x8x32xf32>
    %20 = arith.mulf %19, %1 : vector<2x8x32xf32>
    %cst_11 = arith.constant dense<0.000000e+00> : vector<2x32xf32>
    %21 = vector.multi_reduction <add>, %20, %cst_11 [1] : vector<2x8x32xf32> to vector<2x32xf32>
    %c0_12 = arith.constant 0 : index
    %c0_13 = arith.constant 0 : index
    %22 = vector.load %arg4[%c0_12, %c0_13] : memref<32x32xf32, #tpu.memory_space<vmem>>, vector<32x32xf32>
    %cst_14 = arith.constant dense<0.000000e+00> : vector<2x32xf32>
    %23 = tpu.matmul %21, %22, %cst_14 {dimension_numbers = #tpu.dot_dimension_numbers<[1], [0], [0], [1], [0, 0, 1, 1], [], []>} : vector<2x32xf32>, vector<32x32xf32>, vector<2x32xf32> -> vector<2x32xf32>
    %c0_15 = arith.constant 0 : index
    %c0_16 = arith.constant 0 : index
    %24 = vector.load %arg5[%c0_15, %c0_16] : memref<32x32xf32, #tpu.memory_space<vmem>>, vector<32x32xf32>
    %cst_17 = arith.constant dense<0.000000e+00> : vector<2x32xf32>
    %25 = tpu.matmul %0, %24, %cst_17 {dimension_numbers = #tpu.dot_dimension_numbers<[1], [0], [0], [1], [0, 0, 1, 1], [], []>} : vector<2x32xf32>, vector<32x32xf32>, vector<2x32xf32> -> vector<2x32xf32>
    %26 = arith.addf %23, %25 : vector<2x32xf32>
    %27 = math.tanh %26 : vector<2x32xf32>
    %c0_18 = arith.constant 0 : index
    %c0_19 = arith.constant 0 : index
    %28 = vector.load %arg6[%c0_18, %c0_19] : memref<2x32xf32, #tpu.memory_space<vmem>>, vector<2x32xf32>
    tpu.vector_store %arg6[%c0_18, %c0_19], %27 {strides = array<i32>} : memref<2x32xf32, #tpu.memory_space<vmem>>, vector<2x32xf32>,
    return
  }
  func.func @transform_0(%arg0: i32) -> (i32, i32) {
    %c0_i32 = arith.constant 0 : i32
    %c0_i32_0 = arith.constant 0 : i32
    return %arg0, %c0_i32 : i32, i32
  }
  func.func @transform_1(%arg0: i32) -> (i32, i32, i32) {
    %c0_i32 = arith.constant 0 : i32
    %c0_i32_0 = arith.constant 0 : i32
    %c0_i32_1 = arith.constant 0 : i32
    return %arg0, %c0_i32, %c0_i32_0 : i32, i32, i32
  }
  func.func @transform_2(%arg0: i32) -> (i32, i32) {
    %c0_i32 = arith.constant 0 : i32
    %c0_i32_0 = arith.constant 0 : i32
    %c0_i32_1 = arith.constant 0 : i32
    return %c0_i32, %c0_i32_0 : i32, i32
  }
  func.func @transform_3(%arg0: i32) -> (i32, i32) {
    %c0_i32 = arith.constant 0 : i32
    %c0_i32_0 = arith.constant 0 : i32
    %c0_i32_1 = arith.constant 0 : i32
    return %c0_i32, %c0_i32_0 : i32, i32
  }
  func.func @transform_4(%arg0: i32) -> (i32, i32) {
    %c0_i32 = arith.constant 0 : i32
    %c0_i32_0 = arith.constant 0 : i32
    %c0_i32_1 = arith.constant 0 : i32
    return %c0_i32, %c0_i32_0 : i32, i32
  }
  func.func @transform_5(%arg0: i32) -> (i32, i32) {
    %c0_i32 = arith.constant 0 : i32
    %c0_i32_0 = arith.constant 0 : i32
    return %arg0, %c0_i32 : i32, i32
  }
  func.func @transform_6(%arg0: i32) -> (i32, i32) {
    %c0_i32 = arith.constant 0 : i32
    %c0_i32_0 = arith.constant 0 : i32
    return %arg0, %c0_i32 : i32, i32
  }
}

module attributes {stable_mosaic.version = 11 : i64} {
  func.func @_kernel_unmasked(%arg0: i32, %arg1: memref<2x32xf32, #tpu.memory_space<vmem>>, %arg2: memref<2x8x32xf32, #tpu.memory_space<vmem>>, %arg3: memref<32x32xf32, #tpu.memory_space<vmem>>, %arg4: memref<32x32xf32, #tpu.memory_space<vmem>>, %arg5: memref<32x32xf32, #tpu.memory_space<vmem>>, %arg6: memref<2x32xf32, #tpu.memory_space<vmem>>, %arg7: memref<2x8xf32, #tpu.memory_space<vmem>>) attributes {dimension_semantics = [#tpu.dimension_semantics<parallel>], iteration_bounds = array<i64: 1>, scalar_prefetch = 0 : i64, scratch_operands = 0 : i64, tpu.core_type = #tpu.core_type<tc>, window_params = [{transform_indices = @transform_0, window_bounds = array<i64: 2, 32>}, {transform_indices = @transform_1, window_bounds = array<i64: 2, 8, 32>}, {pipeline_mode = #tpu.pipeline_mode<synchronous>, transform_indices = @transform_2, window_bounds = array<i64: 32, 32>}, {pipeline_mode = #tpu.pipeline_mode<synchronous>, transform_indices = @transform_3, window_bounds = array<i64: 32, 32>}, {pipeline_mode = #tpu.pipeline_mode<synchronous>, transform_indices = @transform_4, window_bounds = array<i64: 32, 32>}, {transform_indices = @transform_5, window_bounds = array<i64: 2, 32>}, {transform_indices = @transform_6, window_bounds = array<i64: 2, 8>}]} {
    %c0 = arith.constant 0 : index
    %c0_0 = arith.constant 0 : index
    %0 = vector.load %arg1[%c0, %c0_0] : memref<2x32xf32, #tpu.memory_space<vmem>>, vector<2x32xf32>
    %c0_1 = arith.constant 0 : index
    %c0_2 = arith.constant 0 : index
    %c0_3 = arith.constant 0 : index
    %1 = vector.load %arg2[%c0_1, %c0_2, %c0_3] : memref<2x8x32xf32, #tpu.memory_space<vmem>>, vector<2x8x32xf32>
    %c0_4 = arith.constant 0 : index
    %c0_5 = arith.constant 0 : index
    %2 = vector.load %arg3[%c0_4, %c0_5] : memref<32x32xf32, #tpu.memory_space<vmem>>, vector<32x32xf32>
    %cst = arith.constant dense<0.000000e+00> : vector<2x32xf32>
    %3 = tpu.matmul %0, %2, %cst {dimension_numbers = #tpu.dot_dimension_numbers<[1], [0], [0], [1], [0, 0, 1, 1], [], []>} : vector<2x32xf32>, vector<32x32xf32>, vector<2x32xf32> -> vector<2x32xf32>
    %4 = vector.shape_cast %3 : vector<2x32xf32> to vector<2x1x32xf32>
    %5 = vector.broadcast %4 : vector<2x1x32xf32> to vector<2x8x32xf32>
    %6 = arith.mulf %5, %1 : vector<2x8x32xf32>
    %cst_6 = arith.constant dense<0.000000e+00> : vector<2x8xf32>
    %7 = vector.multi_reduction <add>, %6, %cst_6 [2] : vector<2x8x32xf32> to vector<2x8xf32>
    %cst_7 = arith.constant dense<0xFF800000> : vector<2xf32>
    %8 = vector.multi_reduction <maximumf>, %7, %cst_7 [1] : vector<2x8xf32> to vector<2xf32>
    %9 = vector.shape_cast %8 : vector<2xf32> to vector<2x1xf32>
    %10 = vector.broadcast %9 : vector<2x1xf32> to vector<2x8xf32>
    %11 = arith.subf %7, %10 : vector<2x8xf32>
    %12 = math.exp %11 : vector<2x8xf32>
    %cst_8 = arith.constant dense<0.000000e+00> : vector<2xf32>
    %13 = vector.multi_reduction <add>, %12, %cst_8 [1] : vector<2x8xf32> to vector<2xf32>
    %14 = vector.shape_cast %13 : vector<2xf32> to vector<2x1xf32>
    %15 = vector.broadcast %14 : vector<2x1xf32> to vector<2x8xf32>
    %16 = arith.divf %12, %15 : vector<2x8xf32>
    %c0_9 = arith.constant 0 : index
    %c0_10 = arith.constant 0 : index
    %17 = vector.load %arg7[%c0_9, %c0_10] : memref<2x8xf32, #tpu.memory_space<vmem>>, vector<2x8xf32>
    tpu.vector_store %arg7[%c0_9, %c0_10], %16 {strides = array<i32>} : memref<2x8xf32, #tpu.memory_space<vmem>>, vector<2x8xf32>,
    %18 = vector.shape_cast %16 : vector<2x8xf32> to vector<2x8x1xf32>
    %19 = vector.broadcast %18 : vector<2x8x1xf32> to vector<2x8x32xf32>
    %20 = arith.mulf %19, %1 : vector<2x8x32xf32>
    %cst_11 = arith.constant dense<0.000000e+00> : vector<2x32xf32>
    %21 = vector.multi_reduction <add>, %20, %cst_11 [1] : vector<2x8x32xf32> to vector<2x32xf32>
    %c0_12 = arith.constant 0 : index
    %c0_13 = arith.constant 0 : index
    %22 = vector.load %arg4[%c0_12, %c0_13] : memref<32x32xf32, #tpu.memory_space<vmem>>, vector<32x32xf32>
    %cst_14 = arith.constant dense<0.000000e+00> : vector<2x32xf32>
    %23 = tpu.matmul %21, %22, %cst_14 {dimension_numbers = #tpu.dot_dimension_numbers<[1], [0], [0], [1], [0, 0, 1, 1], [], []>} : vector<2x32xf32>, vector<32x32xf32>, vector<2x32xf32> -> vector<2x32xf32>
    %c0_15 = arith.constant 0 : index
    %c0_16 = arith.constant 0 : index
    %24 = vector.load %arg5[%c0_15, %c0_16] : memref<32x32xf32, #tpu.memory_space<vmem>>, vector<32x32xf32>
    %cst_17 = arith.constant dense<0.000000e+00> : vector<2x32xf32>
    %25 = tpu.matmul %0, %24, %cst_17 {dimension_numbers = #tpu.dot_dimension_numbers<[1], [0], [0], [1], [0, 0, 1, 1], [], []>} : vector<2x32xf32>, vector<32x32xf32>, vector<2x32xf32> -> vector<2x32xf32>
    %26 = arith.addf %23, %25 : vector<2x32xf32>
    %27 = math.tanh %26 : vector<2x32xf32>
    %c0_18 = arith.constant 0 : index
    %c0_19 = arith.constant 0 : index
    %28 = vector.load %arg6[%c0_18, %c0_19] : memref<2x32xf32, #tpu.memory_space<vmem>>, vector<2x32xf32>
    tpu.vector_store %arg6[%c0_18, %c0_19], %27 {strides = array<i32>} : memref<2x32xf32, #tpu.memory_space<vmem>>, vector<2x32xf32>,
    return
  }
  func.func @transform_0(%arg0: i32) -> (i32, i32) {
    %c0_i32 = arith.constant 0 : i32
    %c0_i32_0 = arith.constant 0 : i32
    return %arg0, %c0_i32 : i32, i32
  }
  func.func @transform_1(%arg0: i32) -> (i32, i32, i32) {
    %c0_i32 = arith.constant 0 : i32
    %c0_i32_0 = arith.constant 0 : i32
    %c0_i32_1 = arith.constant 0 : i32
    return %arg0, %c0_i32, %c0_i32_0 : i32, i32, i32
  }
  func.func @transform_2(%arg0: i32) -> (i32, i32) {
    %c0_i32 = arith.constant 0 : i32
    %c0_i32_0 = arith.constant 0 : i32
    %c0_i32_1 = arith.constant 0 : i32
    return %c0_i32, %c0_i32_0 : i32, i32
  }
  func.func @transform_3(%arg0: i32) -> (i32, i32) {
    %c0_i32 = arith.constant 0 : i32
    %c0_i32_0 = arith.constant 0 : i32
    %c0_i32_1 = arith.constant 0 : i32
    return %c0_i32, %c0_i32_0 : i32, i32
  }
  func.func @transform_4(%arg0: i32) -> (i32, i32) {
    %c0_i32 = arith.constant 0 : i32
    %c0_i32_0 = arith.constant 0 : i32
    %c0_i32_1 = arith.constant 0 : i32
    return %c0_i32, %c0_i32_0 : i32, i32
  }
  func.func @transform_5(%arg0: i32) -> (i32, i32) {
    %c0_i32 = arith.constant 0 : i32
    %c0_i32_0 = arith.constant 0 : i32
    return %arg0, %c0_i32 : i32, i32
  }
  func.func @transform_6(%arg0: i32) -> (i32, i32) {
    %c0_i32 = arith.constant 0 : i32
    %c0_i32_0 = arith.constant 0 : i32
    return %arg0, %c0_i32 : i32, i32
  }
}

</mosaic_0001>

<llo_original>
// kernel: tpu_custom_call.1
$region0: #{tpu_custom_call.1}
  #allocation0 [shape = 'u32[]', space=smem, size = 0x4, offset = 0x4, fixed_abs, tag = 'smem constant byte address 0x4 - core index']
  #allocation1 [shape = 'u32[144,128]{1,0:T(1,128)}', space=vmem, size = 0x12000, scoped, tag = 'internal scratch']
  %s0 = inlined_call_operand.hbm [shape: f32[2,32], index: 0, kind: input, shape index: {}]
  %s1 = inlined_call_operand.hbm [shape: f32[2,8,32], index: 1, kind: input, shape index: {}]
  %s2 = inlined_call_operand.hbm [shape: f32[32,32], index: 2, kind: input, shape index: {}]
  %s3 = inlined_call_operand.hbm [shape: f32[32,32], index: 3, kind: input, shape index: {}]
  %s4 = inlined_call_operand.hbm [shape: f32[32,32], index: 4, kind: input, shape index: {}]
  %s5 = inlined_call_operand.hbm [shape: f32[2,32], index: 5, kind: output, shape index: {0}]
  %s6 = inlined_call_operand.hbm [shape: f32[2,8], index: 6, kind: output, shape index: {1}]
  %7 = xla_tuple %s5, %s6
  %s8 = sld [smem:[#allocation0]]
  $region58: #{tpu_custom_call.1} parent=0
    _
  %s10 = ssub.s32 1, %s8
  %s11 = scalar_select 0, %s10, %s8
  $region1: #{tpu_custom_call.1} parent=0
    #allocation2 [shape = 'u8[1024]{0}', space=vmem, size = 0x400, scoped, tag = 'input window, operand 0, single buffered']
    #allocation3 [shape = 's32[1]{0}', space=sflag, size = 0x4, scoped, tag = 'scoped memory for tpu_custom_call.1']
    #allocation4 [shape = 's32[1]{0}', space=sflag, size = 0x4, scoped, tag = 'scoped memory for tpu_custom_call.1']
    #allocation5 [shape = 'u8[8192]{0}', space=vmem, size = 0x2000, scoped, tag = 'input window, operand 1, single buffered']
    #allocation6 [shape = 's32[1]{0}', space=sflag, size = 0x4, scoped, tag = 'scoped memory for tpu_custom_call.1']
    #allocation7 [shape = 'u8[16384]{0}', space=vmem, size = 0x4000, scoped, tag = 'input window, operand 2, single buffered']
    #allocation8 [shape = 'u8[16384]{0}', space=vmem, size = 0x4000, scoped, tag = 'input window, operand 3, single buffered']
    #allocation9 [shape = 's32[1]{0}', space=sflag, size = 0x4, scoped, tag = 'scoped memory for tpu_custom_call.1']
    #allocation10 [shape = 'u8[16384]{0}', space=vmem, size = 0x4000, scoped, tag = 'input window, operand 4, single buffered']
    #allocation11 [shape = 'u8[1024]{0}', space=vmem, size = 0x400, scoped, tag = 'output window, operand 0, single buffered']
    #allocation12 [shape = 'u8[1024]{0}', space=vmem, size = 0x400, scoped, tag = 'output window, operand 1, single buffered']
    #allocation13 [shape = 's32[1]{0}', space=sflag, size = 0x4, scoped, tag = 'scoped memory for tpu_custom_call.1']
    %12 = vsyncpa [#allocation3], 0
    %13 = vsyncpa [#allocation6], 0
    %14 = vsyncpa [#allocation9], 0
    %15 = vsyncpa [#allocation4], 0
    %16 = vsyncpa [#allocation13], 0
    // Predicated region
    $region2: #{tpu_custom_call.1} parent=1 // pred_check
      _
    $region3: #{tpu_custom_call.1} parent=1 // pred_check_branch
      %18 = sbr.rel (0) target = $region5
    $region4: #{tpu_custom_call.1} parent=1 // pred_region
      %s20 = ssub.s32 32, 32
      %21 = vsyncadd [#allocation3], %s20
      %s23 = sshll.u32 [#allocation2], 4
      %s24 = int_to_ptr.vmem [resolvable:$true] %s23
      %26 = dma.hbm_to_vmem [thread:$0]  %s0, 32, %s24, [#allocation3]
    $region5: #{tpu_custom_call.1} parent=1 // pred_fallthru
      _
    // Predicated region
    $region6: #{tpu_custom_call.1} parent=1 // pred_check
      _
    $region7: #{tpu_custom_call.1} parent=1 // pred_check_branch
      %28 = sbr.rel (0) target = $region9
    $region8: #{tpu_custom_call.1} parent=1 // pred_region
      %s30 = ssub.s32 256, 256
      %31 = vsyncadd [#allocation6], %s30
      %s32 = sshll.u32 [#allocation5], 4
      %s33 = int_to_ptr.vmem [resolvable:$true] %s32
      %38 = dma.hbm_to_vmem [thread:$0]  %s1, 256, %s33, [#allocation6], 128, 128, 8
    $region9: #{tpu_custom_call.1} parent=1 // pred_fallthru
      _
    // Predicated region
    $region10: #{tpu_custom_call.1} parent=1 // pred_check
      _
    $region11: #{tpu_custom_call.1} parent=1 // pred_check_branch
      %40 = sbr.rel (0) target = $region13
    $region12: #{tpu_custom_call.1} parent=1 // pred_region
      %s42 = ssub.s32 512, 512
      %43 = vsyncadd [#allocation6], %s42
      %s44 = sshll.u32 [#allocation7], 4
      %s45 = int_to_ptr.vmem [resolvable:$true] %s44
      %50 = dma.hbm_to_vmem [thread:$0]  %s2, 512, %s45, [#allocation6], 128, 128, 8
    $region13: #{tpu_custom_call.1} parent=1 // pred_fallthru
      _
    // Predicated region
    $region14: #{tpu_custom_call.1} parent=1 // pred_check
      _
    $region15: #{tpu_custom_call.1} parent=1 // pred_check_branch
      %52 = sbr.rel (0) target = $region17
    $region16: #{tpu_custom_call.1} parent=1 // pred_region
      %s54 = ssub.s32 512, 512
      %55 = vsyncadd [#allocation9], %s54
      %s56 = sshll.u32 [#allocation8], 4
      %s57 = int_to_ptr.vmem [resolvable:$true] %s56
      %62 = dma.hbm_to_vmem [thread:$0]  %s3, 512, %s57, [#allocation9], 128, 128, 8
    $region17: #{tpu_custom_call.1} parent=1 // pred_fallthru
      _
    // Predicated region
    $region18: #{tpu_custom_call.1} parent=1 // pred_check
      _
    $region19: #{tpu_custom_call.1} parent=1 // pred_check_branch
      %64 = sbr.rel (0) target = $region21
    $region20: #{tpu_custom_call.1} parent=1 // pred_region
      %s66 = ssub.s32 512, 512
      %67 = vsyncadd [#allocation9], %s66
      %s68 = sshll.u32 [#allocation10], 4
      %s69 = int_to_ptr.vmem [resolvable:$true] %s68
      %74 = dma.hbm_to_vmem [thread:$0]  %s4, 512, %s69, [#allocation9], 128, 128, 8
    $region21: #{tpu_custom_call.1} parent=1 // pred_fallthru
      _
    // Predicated region
    $region22: #{tpu_custom_call.1} parent=1 // pred_check
      _
    $region23: #{tpu_custom_call.1} parent=1 // pred_check_branch
      %76 = sbr.rel (0) target = $region25
    $region24: #{tpu_custom_call.1} parent=1 // pred_region
      %77 = dma.done [#allocation3], 32
    $region25: #{tpu_custom_call.1} parent=1 // pred_fallthru
      _
    // Predicated region
    $region26: #{tpu_custom_call.1} parent=1 // pred_check
      _
    $region27: #{tpu_custom_call.1} parent=1 // pred_check_branch
      %79 = sbr.rel (0) target = $region29
    $region28: #{tpu_custom_call.1} parent=1 // pred_region
      %80 = dma.done [#allocation6], 256
    $region29: #{tpu_custom_call.1} parent=1 // pred_fallthru
      _
    // Predicated region
    $region30: #{tpu_custom_call.1} parent=1 // pred_check
      _
    $region31: #{tpu_custom_call.1} parent=1 // pred_check_branch
      %82 = sbr.rel (0) target = $region33
    $region32: #{tpu_custom_call.1} parent=1 // pred_region
      %83 = dma.done [#allocation6], 512
    $region33: #{tpu_custom_call.1} parent=1 // pred_fallthru
      _
    // Predicated region
    $region34: #{tpu_custom_call.1} parent=1 // pred_check
      _
    $region35: #{tpu_custom_call.1} parent=1 // pred_check_branch
      %85 = sbr.rel (0) target = $region37
    $region36: #{tpu_custom_call.1} parent=1 // pred_region
      %86 = dma.done [#allocation9], 512
    $region37: #{tpu_custom_call.1} parent=1 // pred_fallthru
      _
    // Predicated region
    $region38: #{tpu_custom_call.1} parent=1 // pred_check
      _
    $region39: #{tpu_custom_call.1} parent=1 // pred_check_branch
      %88 = sbr.rel (0) target = $region41
    $region40: #{tpu_custom_call.1} parent=1 // pred_region
      %89 = dma.done [#allocation9], 512
    $region41: #{tpu_custom_call.1} parent=1 // pred_fallthru
      _
    %v90 = vld [vmem:[#allocation2] sm:$0x3]
    %v91 = vld [vmem:[#allocation5] sm:$0xff]
    %v92 = vld [vmem:[#allocation5 + $0x8] sm:$0xff]
    %v93 = vld [vmem:[#allocation7] sm:$0xff]
    %v94 = vld [vmem:[#allocation7 + $0x8] sm:$0xff]
    %v95 = vld [vmem:[#allocation7 + $0x10] sm:$0xff]
    %v96 = vld [vmem:[#allocation7 + $0x18] sm:$0xff]
    %vm97 = vcmask 261120
    %v99 = vsel %vm97, %v90, 0
    %101 = vmatprep.subr.mxu0 0.0
    %102 = vmatpush1.msra.mxu0 0.0
    %103 = vmatprep.subr.mxu0 0.0
    %104 = vmatpush1.msra.mxu0 0.0
    %105 = vmatprep.subr.mxu0 0.0
    %106 = vmatpush1.msra.mxu0 0.0
    %107 = vmatprep.subr.mxu0 0.0
    %108 = vmatpush1.msra.mxu0 0.0
    %109 = vmatprep.subr.mxu0 0.0
    %110 = vmatpush1.msra.mxu0 0.0
    %111 = vmatprep.subr.mxu0 0.0
    %112 = vmatpush1.msra.mxu0 0.0
    %113 = vmatprep.subr.mxu0 0.0
    %114 = vmatpush1.msra.mxu0 0.0
    %115 = vmatprep.subr.mxu0 0.0
    %116 = vmatpush1.msra.mxu0 0.0
    %117 = vmatprep.subr.mxu0 0.0
    %118 = vmatpush1.msra.mxu0 0.0
    %119 = vmatprep.subr.mxu0 0.0
    %120 = vmatpush1.msra.mxu0 0.0
    %121 = vmatprep.subr.mxu0 0.0
    %122 = vmatpush1.msra.mxu0 0.0
    %123 = vmatprep.subr.mxu0 0.0
    %124 = vmatpush1.msra.mxu0 0.0
    %125 = vmatprep.subr.mxu0 0.0
    %126 = vmatpush1.msra.mxu0 %v96
    %127 = vmatprep.subr.mxu0 0.0
    %128 = vmatpush1.msra.mxu0 %v95
    %129 = vmatprep.subr.mxu0 0.0
    %130 = vmatpush1.msra.mxu0 %v94
    %131 = vmatprep.subr.mxu0 0.0
    %132 = vmatpush1.msra.mxu0 %v93
    %133 = vmatprep.subr.mxu0 0.0
    %134 = vmatpush2.msra.mxu0 0.0
    %135 = vmatprep.subr.mxu0 0.0
    %136 = vmatpush2.msra.mxu0 0.0
    %137 = vmatprep.subr.mxu0 0.0
    %138 = vmatpush2.msra.mxu0 0.0
    %139 = vmatprep.subr.mxu0 0.0
    %140 = vmatpush2.msra.mxu0 0.0
    %141 = vmatprep.subr.mxu0 0.0
    %142 = vmatpush2.msra.mxu0 0.0
    %143 = vmatprep.subr.mxu0 0.0
    %144 = vmatpush2.msra.mxu0 0.0
    %145 = vmatprep.subr.mxu0 0.0
    %146 = vmatpush2.msra.mxu0 0.0
    %147 = vmatprep.subr.mxu0 0.0
    %148 = vmatpush2.msra.mxu0 0.0
    %149 = vmatprep.subr.mxu0 0.0
    %150 = vmatpush2.msra.mxu0 0.0
    %151 = vmatprep.subr.mxu0 0.0
    %152 = vmatpush2.msra.mxu0 0.0
    %153 = vmatprep.subr.mxu0 0.0
    %154 = vmatpush2.msra.mxu0 0.0
    %155 = vmatprep.subr.mxu0 0.0
    %156 = vmatpush2.msra.mxu0 0.0
    %157 = vmatprep.subr.mxu0 0.0
    %158 = vmatpush2.msra.mxu0 0.0
    %159 = vmatprep.subr.mxu0 0.0
    %160 = vmatpush2.msra.mxu0 0.0
    %161 = vmatprep.subr.mxu0 0.0
    %162 = vmatpush2.msra.mxu0 0.0
    %163 = vmatprep.subr.mxu0 0.0
    %164 = vmatpush2.msra.mxu0 0.0
    %165 = vmatprep.mubr.f32.mxu0 0.0
    %166 = vmatmul.mubr.f32.gmra.mxu0 %v99
    %v167 = vpop.f32.mrf.mxu0
    %v168 = vadd.f32 0.0, %v167
    %v169 = vpop.f32.mrf.mxu0
    %170 = vdwg.mxu0
    %v173 = vunpack.c.l.s4 1966171168
    %v174 = vunpack.c.0.s8 %v173
    %v175 = vlaneseq
    %v176 = vshrl.u32 %v175, 7
    %v177 = vsub.s32 %v174, %v176
    %v178 = vrot.slane %v168, %v177
    %v179 = vcombine.high %v178, %v178
    %v181 = vunpack.c.l.s4 1966171168
    %v182 = vunpack.c.0.s8 %v181
    %v183 = vlaneseq
    %v184 = vshrl.u32 %v183, 7
    %v185 = vsub.s32 %v182, %v184
    %v186 = vrot.slane %v178, %v185
    %v188 = vunpack.c.l.s4 1966171168
    %v189 = vunpack.c.0.s8 %v188
    %v190 = vlaneseq
    %v191 = vshrl.u32 %v190, 7
    %v192 = vsub.s32 %v189, %v191
    %v193 = vrot.slane %v179, %v192
    %v194 = vlaneseq
    %v195 = vshrl.u32 %v194, 7
    %v196 = vsub.s32 0, %v195
    %v197 = vrot.slane %v186, %v196
    %v198 = vlaneseq
    %v199 = vshrl.u32 %v198, 7
    %v200 = vsub.s32 0, %v199
    %v201 = vrot.slane %v193, %v200
    %v204 = vmul.f32 %v197, %v91
    %v205 = vmul.f32 %v201, %v92
    %v206 = vsel %vm97, %v204, 0.0
    %207 = vadd.xlane.f32.xlu0 %v206
    %v208 = vpop.xlane.xlu0 %207
    %v209 = vsel %vm97, %v205, 0.0
    %210 = vadd.xlane.f32.xlu0 %v209
    %v211 = vpop.xlane.xlu0 %210
    %v214 = vlaneseq
    %v215 = vand.u32 %v214, 127
    %v216 = vlaneseq
    %v217 = vshrl.u32 %v216, 7
    %v218 = vsub.s32 %v215, %v217
    %v219 = vrot.slane %v208, %v218
    %v220 = vlaneseq
    %v221 = vshrl.u32 %v220, 7
    %v222 = vsub.s32 %v215, %v221
    %v223 = vrot.slane %v211, %v222
    %vm224 = vcmask 1041409
    %v225 = vsel %vm224, %v223, %v219
    %vm227 = vcmask 58368
    %v228 = vsel %vm227, %v225, -inf
    %229 = vmax.xlane.f32.xlu0 %v228
    %v230 = vpop.xlane.xlu0 %229
    %v232 = vlaneseq
    %v233 = vshrl.u32 %v232, 7
    %v234 = vsub.s32 0, %v233
    %v235 = vrot.slane %v230, %v234
    %v236 = vlaneseq
    %v237 = vshrl.u32 %v236, 7
    %v238 = vsub.s32 1, %v237
    %v239 = vrot.slane %v230, %v238
    %v242 = vsub.f32 %v208, %v235
    %v243 = vsub.f32 %v211, %v239
    %v244 = vmul.f32 %v242, 1.442695
    %v245 = vpow.pop %v244
    %v246 = vmul.f32 %v243, 1.442695
    %v247 = vpow.pop %v246
    %250 = vset.pattern.permute.xlu0 0
    %251 = vperm.xlu0 %250, %v245
    %v252 = vpop.permute.xlu0 %251
    %253 = vset.pattern.permute.xlu0 0
    %254 = vperm.xlu0 %253, %v247
    %v255 = vpop.permute.xlu0 %254
    %v256 = vlaneseq
    %v257 = vshrl.u32 %v256, 7
    %v258 = vsub.s32 %v215, %v257
    %v259 = vrot.slane %v252, %v258
    %v260 = vlaneseq
    %v261 = vshrl.u32 %v260, 7
    %v262 = vsub.s32 %v215, %v261
    %v263 = vrot.slane %v255, %v262
    %v264 = vsel %vm224, %v263, %v259
    %v266 = vsel %vm227, %v264, 0.0
    %267 = vadd.xlane.f32.xlu0 %v266
    %v268 = vpop.xlane.xlu0 %267
    %v270 = vlaneseq
    %v271 = vshrl.u32 %v270, 7
    %v272 = vsub.s32 0, %v271
    %v273 = vrot.slane %v268, %v272
    %v274 = vlaneseq
    %v275 = vshrl.u32 %v274, 7
    %v276 = vsub.s32 1, %v275
    %v277 = vrot.slane %v268, %v276
    %v280 = vrcp.pop %v273
    %v281 = vmul.f32 %v245, %v280
    %v282 = vrcp.pop %v277
    %v283 = vmul.f32 %v247, %v282
    %286 = vset.pattern.permute.xlu0 0
    %287 = vperm.xlu0 %286, %v281
    %v288 = vpop.permute.xlu0 %287
    %289 = vset.pattern.permute.xlu0 0
    %290 = vperm.xlu0 %289, %v283
    %v291 = vpop.permute.xlu0 %290
    %v292 = vlaneseq
    %v293 = vshrl.u32 %v292, 7
    %v294 = vsub.s32 %v215, %v293
    %v295 = vrot.slane %v288, %v294
    %v296 = vlaneseq
    %v297 = vshrl.u32 %v296, 7
    %v298 = vsub.s32 %v215, %v297
    %v299 = vrot.slane %v291, %v298
    %v300 = vsel %vm224, %v299, %v295
    %302 = vst.msk [vmem:[#allocation12] sm:$0x3] %vm227, %v300
    %v305 = vmul.f32 %v288, %v91
    %v306 = vmul.f32 %v291, %v92
    %v307 = vsel %vm97, %v305, 0.0
    %v308 = vrot.slane %v307, 4
    %v309 = vadd.f32 %v307, %v308
    %v310 = vrot.slane %v309, 2
    %v311 = vadd.f32 %v309, %v310
    %v312 = vrot.slane %v311, 1
    %v313 = vadd.f32 %v311, %v312
    %v314 = vsel %vm97, %v306, 0.0
    %v315 = vrot.slane %v314, 4
    %v316 = vadd.f32 %v314, %v315
    %v317 = vrot.slane %v316, 2
    %v318 = vadd.f32 %v316, %v317
    %v319 = vrot.slane %v318, 1
    %v320 = vadd.f32 %v318, %v319
    %v321 = vld [vmem:[#allocation8] sm:$0xff]
    %v322 = vld [vmem:[#allocation8 + $0x8] sm:$0xff]
    %v323 = vld [vmem:[#allocation8 + $0x10] sm:$0xff]
    %v324 = vld [vmem:[#allocation8 + $0x18] sm:$0xff]
    %v325 = vld [vmem:[#allocation10] sm:$0xff]
    %v326 = vld [vmem:[#allocation10 + $0x8] sm:$0xff]
    %v327 = vld [vmem:[#allocation10 + $0x10] sm:$0xff]
    %v328 = vld [vmem:[#allocation10 + $0x18] sm:$0xff]
    %329 = vmatprep.subr.mxu0 0.0
    %330 = vmatpush1.msra.mxu0 0.0
    %331 = vmatprep.subr.mxu0 0.0
    %332 = vmatpush1.msra.mxu0 0.0
    %333 = vmatprep.subr.mxu0 0.0
    %334 = vmatpush1.msra.mxu0 0.0
    %335 = vmatprep.subr.mxu0 0.0
    %336 = vmatpush1.msra.mxu0 0.0
    %337 = vmatprep.subr.mxu0 0.0
    %338 = vmatpush1.msra.mxu0 0.0
    %339 = vmatprep.subr.mxu0 0.0
    %340 = vmatpush1.msra.mxu0 0.0
    %341 = vmatprep.subr.mxu0 0.0
    %342 = vmatpush1.msra.mxu0 0.0
    %343 = vmatprep.subr.mxu0 0.0
    %344 = vmatpush1.msra.mxu0 0.0
    %345 = vmatprep.subr.mxu0 0.0
    %346 = vmatpush1.msra.mxu0 0.0
    %347 = vmatprep.subr.mxu0 0.0
    %348 = vmatpush1.msra.mxu0 0.0
    %349 = vmatprep.subr.mxu0 0.0
    %350 = vmatpush1.msra.mxu0 0.0
    %351 = vmatprep.subr.mxu0 0.0
    %352 = vmatpush1.msra.mxu0 0.0
    %353 = vmatprep.subr.mxu0 0.0
    %354 = vmatpush1.msra.mxu0 %v328
    %355 = vmatprep.subr.mxu0 0.0
    %356 = vmatpush1.msra.mxu0 %v327
    %357 = vmatprep.subr.mxu0 0.0
    %358 = vmatpush1.msra.mxu0 %v326
    %359 = vmatprep.subr.mxu0 0.0
    %360 = vmatpush1.msra.mxu0 %v325
    %361 = vmatprep.subr.mxu0 0.0
    %362 = vmatpush2.msra.mxu0 0.0
    %363 = vmatprep.subr.mxu0 0.0
    %364 = vmatpush2.msra.mxu0 0.0
    %365 = vmatprep.subr.mxu0 0.0
    %366 = vmatpush2.msra.mxu0 0.0
    %367 = vmatprep.subr.mxu0 0.0
    %368 = vmatpush2.msra.mxu0 0.0
    %369 = vmatprep.subr.mxu0 0.0
    %370 = vmatpush2.msra.mxu0 0.0
    %371 = vmatprep.subr.mxu0 0.0
    %372 = vmatpush2.msra.mxu0 0.0
    %373 = vmatprep.subr.mxu0 0.0
    %374 = vmatpush2.msra.mxu0 0.0
    %375 = vmatprep.subr.mxu0 0.0
    %376 = vmatpush2.msra.mxu0 0.0
    %377 = vmatprep.subr.mxu0 0.0
    %378 = vmatpush2.msra.mxu0 0.0
    %379 = vmatprep.subr.mxu0 0.0
    %380 = vmatpush2.msra.mxu0 0.0
    %381 = vmatprep.subr.mxu0 0.0
    %382 = vmatpush2.msra.mxu0 0.0
    %383 = vmatprep.subr.mxu0 0.0
    %384 = vmatpush2.msra.mxu0 0.0
    %385 = vmatprep.subr.mxu0 0.0
    %386 = vmatpush2.msra.mxu0 0.0
    %387 = vmatprep.subr.mxu0 0.0
    %388 = vmatpush2.msra.mxu0 0.0
    %389 = vmatprep.subr.mxu0 0.0
    %390 = vmatpush2.msra.mxu0 0.0
    %391 = vmatprep.subr.mxu0 0.0
    %392 = vmatpush2.msra.mxu0 0.0
    %393 = vmatprep.mubr.f32.mxu0 0.0
    %394 = vmatmul.mubr.f32.gmra.mxu0 %v99
    %v395 = vpop.f32.mrf.mxu0
    %v396 = vadd.f32 0.0, %v395
    %v397 = vpop.f32.mrf.mxu0
    %398 = vdwg.mxu0
    %v401 = vsel %vm224, %v320, %v313
    %v402 = vsel %vm97, %v401, 0
    %404 = vmatprep.subr.mxu0 0.0
    %405 = vmatpush1.msra.mxu0 0.0
    %406 = vmatprep.subr.mxu0 0.0
    %407 = vmatpush1.msra.mxu0 0.0
    %408 = vmatprep.subr.mxu0 0.0
    %409 = vmatpush1.msra.mxu0 0.0
    %410 = vmatprep.subr.mxu0 0.0
    %411 = vmatpush1.msra.mxu0 0.0
    %412 = vmatprep.subr.mxu0 0.0
    %413 = vmatpush1.msra.mxu0 0.0
    %414 = vmatprep.subr.mxu0 0.0
    %415 = vmatpush1.msra.mxu0 0.0
    %416 = vmatprep.subr.mxu0 0.0
    %417 = vmatpush1.msra.mxu0 0.0
    %418 = vmatprep.subr.mxu0 0.0
    %419 = vmatpush1.msra.mxu0 0.0
    %420 = vmatprep.subr.mxu0 0.0
    %421 = vmatpush1.msra.mxu0 0.0
    %422 = vmatprep.subr.mxu0 0.0
    %423 = vmatpush1.msra.mxu0 0.0
    %424 = vmatprep.subr.mxu0 0.0
    %425 = vmatpush1.msra.mxu0 0.0
    %426 = vmatprep.subr.mxu0 0.0
    %427 = vmatpush1.msra.mxu0 0.0
    %428 = vmatprep.subr.mxu0 0.0
    %429 = vmatpush1.msra.mxu0 %v324
    %430 = vmatprep.subr.mxu0 0.0
    %431 = vmatpush1.msra.mxu0 %v323
    %432 = vmatprep.subr.mxu0 0.0
    %433 = vmatpush1.msra.mxu0 %v322
    %434 = vmatprep.subr.mxu0 0.0
    %435 = vmatpush1.msra.mxu0 %v321
    %436 = vmatprep.subr.mxu0 0.0
    %437 = vmatpush2.msra.mxu0 0.0
    %438 = vmatprep.subr.mxu0 0.0
    %439 = vmatpush2.msra.mxu0 0.0
    %440 = vmatprep.subr.mxu0 0.0
    %441 = vmatpush2.msra.mxu0 0.0
    %442 = vmatprep.subr.mxu0 0.0
    %443 = vmatpush2.msra.mxu0 0.0
    %444 = vmatprep.subr.mxu0 0.0
    %445 = vmatpush2.msra.mxu0 0.0
    %446 = vmatprep.subr.mxu0 0.0
    %447 = vmatpush2.msra.mxu0 0.0
    %448 = vmatprep.subr.mxu0 0.0
    %449 = vmatpush2.msra.mxu0 0.0
    %450 = vmatprep.subr.mxu0 0.0
    %451 = vmatpush2.msra.mxu0 0.0
    %452 = vmatprep.subr.mxu0 0.0
    %453 = vmatpush2.msra.mxu0 0.0
    %454 = vmatprep.subr.mxu0 0.0
    %455 = vmatpush2.msra.mxu0 0.0
    %456 = vmatprep.subr.mxu0 0.0
    %457 = vmatpush2.msra.mxu0 0.0
    %458 = vmatprep.subr.mxu0 0.0
    %459 = vmatpush2.msra.mxu0 0.0
    %460 = vmatprep.subr.mxu0 0.0
    %461 = vmatpush2.msra.mxu0 0.0
    %462 = vmatprep.subr.mxu0 0.0
    %463 = vmatpush2.msra.mxu0 0.0
    %464 = vmatprep.subr.mxu0 0.0
    %465 = vmatpush2.msra.mxu0 0.0
    %466 = vmatprep.subr.mxu0 0.0
    %467 = vmatpush2.msra.mxu0 0.0
    %468 = vmatprep.mubr.f32.mxu0 0.0
    %469 = vmatmul.mubr.f32.gmra.mxu0 %v402
    %v470 = vpop.f32.mrf.mxu0
    %v471 = vadd.f32 %v396, %v470
    %v472 = vpop.f32.mrf.mxu0
    %473 = vdwg.mxu0
    %v474 = vtanh.pop %v471
    %vm475 = vcmask 254976
    %476 = vst.msk [vmem:[#allocation11] sm:$0x3] %vm475, %v474
    // Predicated region
    $region42: #{tpu_custom_call.1} parent=1 // pred_check
      _
    $region43: #{tpu_custom_call.1} parent=1 // pred_check_branch
      %478 = sbr.rel (0) target = $region45
    $region44: #{tpu_custom_call.1} parent=1 // pred_region
      %s480 = ssub.s32 32, 32
      %481 = vsyncadd [#allocation4], %s480
      %s483 = sshll.u32 [#allocation11], 4
      %s484 = int_to_ptr.vmem [resolvable:$true] %s483
      %486 = dma.vmem_to_hbm [thread:$0]  %s484, 32, %s5, [#allocation4]
    $region45: #{tpu_custom_call.1} parent=1 // pred_fallthru
      _
    // Predicated region
    $region46: #{tpu_custom_call.1} parent=1 // pred_check
      _
    $region47: #{tpu_custom_call.1} parent=1 // pred_check_branch
      %488 = sbr.rel (0) target = $region49
    $region48: #{tpu_custom_call.1} parent=1 // pred_region
      %s490 = ssub.s32 32, 32
      %491 = vsyncadd [#allocation13], %s490
      %s493 = sshll.u32 [#allocation12], 4
      %s494 = int_to_ptr.vmem [resolvable:$true] %s493
      %496 = dma.vmem_to_hbm [thread:$0]  %s494, 32, %s6, [#allocation13]
    $region49: #{tpu_custom_call.1} parent=1 // pred_fallthru
      _
    // Predicated region
    $region50: #{tpu_custom_call.1} parent=1 // pred_check
      _
    $region51: #{tpu_custom_call.1} parent=1 // pred_check_branch
      %498 = sbr.rel (0) target = $region53
    $region52: #{tpu_custom_call.1} parent=1 // pred_region
      %499 = dma.done [#allocation4], 32
    $region53: #{tpu_custom_call.1} parent=1 // pred_fallthru
      _
    // Predicated region
    $region54: #{tpu_custom_call.1} parent=1 // pred_check
      _
    $region55: #{tpu_custom_call.1} parent=1 // pred_check_branch
      %501 = sbr.rel (0) target = $region57
    $region56: #{tpu_custom_call.1} parent=1 // pred_region
      %502 = dma.done [#allocation13], 32
    $region57: #{tpu_custom_call.1} parent=1 // pred_fallthru
      _
    %503 = vsyncpa [#allocation3], 1
    %504 = vsyncpa [#allocation6], 1
    %505 = vsyncpa [#allocation9], 1
    %506 = vsyncpa [#allocation4], 1
    %507 = vsyncpa [#allocation13], 1

// kernel: tpu_custom_call.1
$region0: #{tpu_custom_call.1}
  #allocation0 [shape = 'u32[]', space=smem, size = 0x4, offset = 0x4, fixed_abs, tag = 'smem constant byte address 0x4 - core index']
  #allocation1 [shape = 'u32[144,128]{1,0:T(1,128)}', space=vmem, size = 0x12000, scoped, tag = 'internal scratch']
  %s0 = inlined_call_operand.hbm [shape: f32[2,32], index: 0, kind: input, shape index: {}]
  %s1 = inlined_call_operand.hbm [shape: f32[2,8,32], index: 1, kind: input, shape index: {}]
  %s2 = inlined_call_operand.hbm [shape: f32[32,32], index: 2, kind: input, shape index: {}]
  %s3 = inlined_call_operand.hbm [shape: f32[32,32], index: 3, kind: input, shape index: {}]
  %s4 = inlined_call_operand.hbm [shape: f32[32,32], index: 4, kind: input, shape index: {}]
  %s5 = inlined_call_operand.hbm [shape: f32[2,32], index: 5, kind: output, shape index: {0}]
  %s6 = inlined_call_operand.hbm [shape: f32[2,8], index: 6, kind: output, shape index: {1}]
  %7 = xla_tuple %s5, %s6
  %s8 = sld [smem:[#allocation0]]
  $region58: #{tpu_custom_call.1} parent=0
    _
  %s10 = ssub.s32 1, %s8
  %s11 = scalar_select 0, %s10, %s8
  $region1: #{tpu_custom_call.1} parent=0
    #allocation2 [shape = 'u8[1024]{0}', space=vmem, size = 0x400, scoped, tag = 'input window, operand 0, single buffered']
    #allocation3 [shape = 's32[1]{0}', space=sflag, size = 0x4, scoped, tag = 'scoped memory for tpu_custom_call.1']
    #allocation4 [shape = 's32[1]{0}', space=sflag, size = 0x4, scoped, tag = 'scoped memory for tpu_custom_call.1']
    #allocation5 [shape = 'u8[8192]{0}', space=vmem, size = 0x2000, scoped, tag = 'input window, operand 1, single buffered']
    #allocation6 [shape = 's32[1]{0}', space=sflag, size = 0x4, scoped, tag = 'scoped memory for tpu_custom_call.1']
    #allocation7 [shape = 'u8[16384]{0}', space=vmem, size = 0x4000, scoped, tag = 'input window, operand 2, single buffered']
    #allocation8 [shape = 'u8[16384]{0}', space=vmem, size = 0x4000, scoped, tag = 'input window, operand 3, single buffered']
    #allocation9 [shape = 's32[1]{0}', space=sflag, size = 0x4, scoped, tag = 'scoped memory for tpu_custom_call.1']
    #allocation10 [shape = 'u8[16384]{0}', space=vmem, size = 0x4000, scoped, tag = 'input window, operand 4, single buffered']
    #allocation11 [shape = 'u8[1024]{0}', space=vmem, size = 0x400, scoped, tag = 'output window, operand 0, single buffered']
    #allocation12 [shape = 'u8[1024]{0}', space=vmem, size = 0x400, scoped, tag = 'output window, operand 1, single buffered']
    #allocation13 [shape = 's32[1]{0}', space=sflag, size = 0x4, scoped, tag = 'scoped memory for tpu_custom_call.1']
    %12 = vsyncpa [#allocation3], 0
    %13 = vsyncpa [#allocation6], 0
    %14 = vsyncpa [#allocation9], 0
    %15 = vsyncpa [#allocation4], 0
    %16 = vsyncpa [#allocation13], 0
    // Predicated region
    $region2: #{tpu_custom_call.1} parent=1 // pred_check
      _
    $region3: #{tpu_custom_call.1} parent=1 // pred_check_branch
      %18 = sbr.rel (0) target = $region5
    $region4: #{tpu_custom_call.1} parent=1 // pred_region
      %s20 = ssub.s32 32, 32
      %21 = vsyncadd [#allocation3], %s20
      %s23 = sshll.u32 [#allocation2], 4
      %s24 = int_to_ptr.vmem [resolvable:$true] %s23
      %26 = dma.hbm_to_vmem [thread:$0]  %s0, 32, %s24, [#allocation3]
    $region5: #{tpu_custom_call.1} parent=1 // pred_fallthru
      _
    // Predicated region
    $region6: #{tpu_custom_call.1} parent=1 // pred_check
      _
    $region7: #{tpu_custom_call.1} parent=1 // pred_check_branch
      %28 = sbr.rel (0) target = $region9
    $region8: #{tpu_custom_call.1} parent=1 // pred_region
      %s30 = ssub.s32 256, 256
      %31 = vsyncadd [#allocation6], %s30
      %s32 = sshll.u32 [#allocation5], 4
      %s33 = int_to_ptr.vmem [resolvable:$true] %s32
      %38 = dma.hbm_to_vmem [thread:$0]  %s1, 256, %s33, [#allocation6], 128, 128, 8
    $region9: #{tpu_custom_call.1} parent=1 // pred_fallthru
      _
    // Predicated region
    $region10: #{tpu_custom_call.1} parent=1 // pred_check
      _
    $region11: #{tpu_custom_call.1} parent=1 // pred_check_branch
      %40 = sbr.rel (0) target = $region13
    $region12: #{tpu_custom_call.1} parent=1 // pred_region
      %s42 = ssub.s32 512, 512
      %43 = vsyncadd [#allocation6], %s42
      %s44 = sshll.u32 [#allocation7], 4
      %s45 = int_to_ptr.vmem [resolvable:$true] %s44
      %50 = dma.hbm_to_vmem [thread:$0]  %s2, 512, %s45, [#allocation6], 128, 128, 8
    $region13: #{tpu_custom_call.1} parent=1 // pred_fallthru
      _
    // Predicated region
    $region14: #{tpu_custom_call.1} parent=1 // pred_check
      _
    $region15: #{tpu_custom_call.1} parent=1 // pred_check_branch
      %52 = sbr.rel (0) target = $region17
    $region16: #{tpu_custom_call.1} parent=1 // pred_region
      %s54 = ssub.s32 512, 512
      %55 = vsyncadd [#allocation9], %s54
      %s56 = sshll.u32 [#allocation8], 4
      %s57 = int_to_ptr.vmem [resolvable:$true] %s56
      %62 = dma.hbm_to_vmem [thread:$0]  %s3, 512, %s57, [#allocation9], 128, 128, 8
    $region17: #{tpu_custom_call.1} parent=1 // pred_fallthru
      _
    // Predicated region
    $region18: #{tpu_custom_call.1} parent=1 // pred_check
      _
    $region19: #{tpu_custom_call.1} parent=1 // pred_check_branch
      %64 = sbr.rel (0) target = $region21
    $region20: #{tpu_custom_call.1} parent=1 // pred_region
      %s66 = ssub.s32 512, 512
      %67 = vsyncadd [#allocation9], %s66
      %s68 = sshll.u32 [#allocation10], 4
      %s69 = int_to_ptr.vmem [resolvable:$true] %s68
      %74 = dma.hbm_to_vmem [thread:$0]  %s4, 512, %s69, [#allocation9], 128, 128, 8
    $region21: #{tpu_custom_call.1} parent=1 // pred_fallthru
      _
    // Predicated region
    $region22: #{tpu_custom_call.1} parent=1 // pred_check
      _
    $region23: #{tpu_custom_call.1} parent=1 // pred_check_branch
      %76 = sbr.rel (0) target = $region25
    $region24: #{tpu_custom_call.1} parent=1 // pred_region
      %77 = dma.done [#allocation3], 32
    $region25: #{tpu_custom_call.1} parent=1 // pred_fallthru
      _
    // Predicated region
    $region26: #{tpu_custom_call.1} parent=1 // pred_check
      _
    $region27: #{tpu_custom_call.1} parent=1 // pred_check_branch
      %79 = sbr.rel (0) target = $region29
    $region28: #{tpu_custom_call.1} parent=1 // pred_region
      %80 = dma.done [#allocation6], 256
    $region29: #{tpu_custom_call.1} parent=1 // pred_fallthru
      _
    // Predicated region
    $region30: #{tpu_custom_call.1} parent=1 // pred_check
      _
    $region31: #{tpu_custom_call.1} parent=1 // pred_check_branch
      %82 = sbr.rel (0) target = $region33
    $region32: #{tpu_custom_call.1} parent=1 // pred_region
      %83 = dma.done [#allocation6], 512
    $region33: #{tpu_custom_call.1} parent=1 // pred_fallthru
      _
    // Predicated region
    $region34: #{tpu_custom_call.1} parent=1 // pred_check
      _
    $region35: #{tpu_custom_call.1} parent=1 // pred_check_branch
      %85 = sbr.rel (0) target = $region37
    $region36: #{tpu_custom_call.1} parent=1 // pred_region
      %86 = dma.done [#allocation9], 512
    $region37: #{tpu_custom_call.1} parent=1 // pred_fallthru
      _
    // Predicated region
    $region38: #{tpu_custom_call.1} parent=1 // pred_check
      _
    $region39: #{tpu_custom_call.1} parent=1 // pred_check_branch
      %88 = sbr.rel (0) target = $region41
    $region40: #{tpu_custom_call.1} parent=1 // pred_region
      %89 = dma.done [#allocation9], 512
    $region41: #{tpu_custom_call.1} parent=1 // pred_fallthru
      _
    %v90 = vld [vmem:[#allocation2] sm:$0x3]
    %v91 = vld [vmem:[#allocation5] sm:$0xff]
    %v92 = vld [vmem:[#allocation5 + $0x8] sm:$0xff]
    %v93 = vld [vmem:[#allocation7] sm:$0xff]
    %v94 = vld [vmem:[#allocation7 + $0x8] sm:$0xff]
    %v95 = vld [vmem:[#allocation7 + $0x10] sm:$0xff]
    %v96 = vld [vmem:[#allocation7 + $0x18] sm:$0xff]
    %vm97 = vcmask 261120
    %v99 = vsel %vm97, %v90, 0
    %101 = vmatprep.subr.mxu0 0.0
    %102 = vmatpush1.msra.mxu0 0.0
    %103 = vmatprep.subr.mxu0 0.0
    %104 = vmatpush1.msra.mxu0 0.0
    %105 = vmatprep.subr.mxu0 0.0
    %106 = vmatpush1.msra.mxu0 0.0
    %107 = vmatprep.subr.mxu0 0.0
    %108 = vmatpush1.msra.mxu0 0.0
    %109 = vmatprep.subr.mxu0 0.0
    %110 = vmatpush1.msra.mxu0 0.0
    %111 = vmatprep.subr.mxu0 0.0
    %112 = vmatpush1.msra.mxu0 0.0
    %113 = vmatprep.subr.mxu0 0.0
    %114 = vmatpush1.msra.mxu0 0.0
    %115 = vmatprep.subr.mxu0 0.0
    %116 = vmatpush1.msra.mxu0 0.0
    %117 = vmatprep.subr.mxu0 0.0
    %118 = vmatpush1.msra.mxu0 0.0
    %119 = vmatprep.subr.mxu0 0.0
    %120 = vmatpush1.msra.mxu0 0.0
    %121 = vmatprep.subr.mxu0 0.0
    %122 = vmatpush1.msra.mxu0 0.0
    %123 = vmatprep.subr.mxu0 0.0
    %124 = vmatpush1.msra.mxu0 0.0
    %125 = vmatprep.subr.mxu0 0.0
    %126 = vmatpush1.msra.mxu0 %v96
    %127 = vmatprep.subr.mxu0 0.0
    %128 = vmatpush1.msra.mxu0 %v95
    %129 = vmatprep.subr.mxu0 0.0
    %130 = vmatpush1.msra.mxu0 %v94
    %131 = vmatprep.subr.mxu0 0.0
    %132 = vmatpush1.msra.mxu0 %v93
    %133 = vmatprep.subr.mxu0 0.0
    %134 = vmatpush2.msra.mxu0 0.0
    %135 = vmatprep.subr.mxu0 0.0
    %136 = vmatpush2.msra.mxu0 0.0
    %137 = vmatprep.subr.mxu0 0.0
    %138 = vmatpush2.msra.mxu0 0.0
    %139 = vmatprep.subr.mxu0 0.0
    %140 = vmatpush2.msra.mxu0 0.0
    %141 = vmatprep.subr.mxu0 0.0
    %142 = vmatpush2.msra.mxu0 0.0
    %143 = vmatprep.subr.mxu0 0.0
    %144 = vmatpush2.msra.mxu0 0.0
    %145 = vmatprep.subr.mxu0 0.0
    %146 = vmatpush2.msra.mxu0 0.0
    %147 = vmatprep.subr.mxu0 0.0
    %148 = vmatpush2.msra.mxu0 0.0
    %149 = vmatprep.subr.mxu0 0.0
    %150 = vmatpush2.msra.mxu0 0.0
    %151 = vmatprep.subr.mxu0 0.0
    %152 = vmatpush2.msra.mxu0 0.0
    %153 = vmatprep.subr.mxu0 0.0
    %154 = vmatpush2.msra.mxu0 0.0
    %155 = vmatprep.subr.mxu0 0.0
    %156 = vmatpush2.msra.mxu0 0.0
    %157 = vmatprep.subr.mxu0 0.0
    %158 = vmatpush2.msra.mxu0 0.0
    %159 = vmatprep.subr.mxu0 0.0
    %160 = vmatpush2.msra.mxu0 0.0
    %161 = vmatprep.subr.mxu0 0.0
    %162 = vmatpush2.msra.mxu0 0.0
    %163 = vmatprep.subr.mxu0 0.0
    %164 = vmatpush2.msra.mxu0 0.0
    %165 = vmatprep.mubr.f32.mxu0 0.0
    %166 = vmatmul.mubr.f32.gmra.mxu0 %v99
    %v167 = vpop.f32.mrf.mxu0
    %v168 = vadd.f32 0.0, %v167
    %v169 = vpop.f32.mrf.mxu0
    %170 = vdwg.mxu0
    %v173 = vunpack.c.l.s4 1966171168
    %v174 = vunpack.c.0.s8 %v173
    %v175 = vlaneseq
    %v176 = vshrl.u32 %v175, 7
    %v177 = vsub.s32 %v174, %v176
    %v178 = vrot.slane %v168, %v177
    %v179 = vcombine.high %v178, %v178
    %v181 = vunpack.c.l.s4 1966171168
    %v182 = vunpack.c.0.s8 %v181
    %v183 = vlaneseq
    %v184 = vshrl.u32 %v183, 7
    %v185 = vsub.s32 %v182, %v184
    %v186 = vrot.slane %v178, %v185
    %v188 = vunpack.c.l.s4 1966171168
    %v189 = vunpack.c.0.s8 %v188
    %v190 = vlaneseq
    %v191 = vshrl.u32 %v190, 7
    %v192 = vsub.s32 %v189, %v191
    %v193 = vrot.slane %v179, %v192
    %v194 = vlaneseq
    %v195 = vshrl.u32 %v194, 7
    %v196 = vsub.s32 0, %v195
    %v197 = vrot.slane %v186, %v196
    %v198 = vlaneseq
    %v199 = vshrl.u32 %v198, 7
    %v200 = vsub.s32 0, %v199
    %v201 = vrot.slane %v193, %v200
    %v204 = vmul.f32 %v197, %v91
    %v205 = vmul.f32 %v201, %v92
    %v206 = vsel %vm97, %v204, 0.0
    %207 = vadd.xlane.f32.xlu0 %v206
    %v208 = vpop.xlane.xlu0 %207
    %v209 = vsel %vm97, %v205, 0.0
    %210 = vadd.xlane.f32.xlu0 %v209
    %v211 = vpop.xlane.xlu0 %210
    %v214 = vlaneseq
    %v215 = vand.u32 %v214, 127
    %v216 = vlaneseq
    %v217 = vshrl.u32 %v216, 7
    %v218 = vsub.s32 %v215, %v217
    %v219 = vrot.slane %v208, %v218
    %v220 = vlaneseq
    %v221 = vshrl.u32 %v220, 7
    %v222 = vsub.s32 %v215, %v221
    %v223 = vrot.slane %v211, %v222
    %vm224 = vcmask 1041409
    %v225 = vsel %vm224, %v223, %v219
    %vm227 = vcmask 58368
    %v228 = vsel %vm227, %v225, -inf
    %229 = vmax.xlane.f32.xlu0 %v228
    %v230 = vpop.xlane.xlu0 %229
    %v232 = vlaneseq
    %v233 = vshrl.u32 %v232, 7
    %v234 = vsub.s32 0, %v233
    %v235 = vrot.slane %v230, %v234
    %v236 = vlaneseq
    %v237 = vshrl.u32 %v236, 7
    %v238 = vsub.s32 1, %v237
    %v239 = vrot.slane %v230, %v238
    %v242 = vsub.f32 %v208, %v235
    %v243 = vsub.f32 %v211, %v239
    %v244 = vmul.f32 %v242, 1.442695
    %v245 = vpow.pop %v244
    %v246 = vmul.f32 %v243, 1.442695
    %v247 = vpow.pop %v246
    %250 = vset.pattern.permute.xlu0 0
    %251 = vperm.xlu0 %250, %v245
    %v252 = vpop.permute.xlu0 %251
    %253 = vset.pattern.permute.xlu0 0
    %254 = vperm.xlu0 %253, %v247
    %v255 = vpop.permute.xlu0 %254
    %v256 = vlaneseq
    %v257 = vshrl.u32 %v256, 7
    %v258 = vsub.s32 %v215, %v257
    %v259 = vrot.slane %v252, %v258
    %v260 = vlaneseq
    %v261 = vshrl.u32 %v260, 7
    %v262 = vsub.s32 %v215, %v261
    %v263 = vrot.slane %v255, %v262
    %v264 = vsel %vm224, %v263, %v259
    %v266 = vsel %vm227, %v264, 0.0
    %267 = vadd.xlane.f32.xlu0 %v266
    %v268 = vpop.xlane.xlu0 %267
    %v270 = vlaneseq
    %v271 = vshrl.u32 %v270, 7
    %v272 = vsub.s32 0, %v271
    %v273 = vrot.slane %v268, %v272
    %v274 = vlaneseq
    %v275 = vshrl.u32 %v274, 7
    %v276 = vsub.s32 1, %v275
    %v277 = vrot.slane %v268, %v276
    %v280 = vrcp.pop %v273
    %v281 = vmul.f32 %v245, %v280
    %v282 = vrcp.pop %v277
    %v283 = vmul.f32 %v247, %v282
    %286 = vset.pattern.permute.xlu0 0
    %287 = vperm.xlu0 %286, %v281
    %v288 = vpop.permute.xlu0 %287
    %289 = vset.pattern.permute.xlu0 0
    %290 = vperm.xlu0 %289, %v283
    %v291 = vpop.permute.xlu0 %290
    %v292 = vlaneseq
    %v293 = vshrl.u32 %v292, 7
    %v294 = vsub.s32 %v215, %v293
    %v295 = vrot.slane %v288, %v294
    %v296 = vlaneseq
    %v297 = vshrl.u32 %v296, 7
    %v298 = vsub.s32 %v215, %v297
    %v299 = vrot.slane %v291, %v298
    %v300 = vsel %vm224, %v299, %v295
    %302 = vst.msk [vmem:[#allocation12] sm:$0x3] %vm227, %v300
    %v305 = vmul.f32 %v288, %v91
    %v306 = vmul.f32 %v291, %v92
    %v307 = vsel %vm97, %v305, 0.0
    %v308 = vrot.slane %v307, 4
    %v309 = vadd.f32 %v307, %v308
    %v310 = vrot.slane %v309, 2
    %v311 = vadd.f32 %v309, %v310
    %v312 = vrot.slane %v311, 1
    %v313 = vadd.f32 %v311, %v312
    %v314 = vsel %vm97, %v306, 0.0
    %v315 = vrot.slane %v314, 4
    %v316 = vadd.f32 %v314, %v315
    %v317 = vrot.slane %v316, 2
    %v318 = vadd.f32 %v316, %v317
    %v319 = vrot.slane %v318, 1
    %v320 = vadd.f32 %v318, %v319
    %v321 = vld [vmem:[#allocation8] sm:$0xff]
    %v322 = vld [vmem:[#allocation8 + $0x8] sm:$0xff]
    %v323 = vld [vmem:[#allocation8 + $0x10] sm:$0xff]
    %v324 = vld [vmem:[#allocation8 + $0x18] sm:$0xff]
    %v325 = vld [vmem:[#allocation10] sm:$0xff]
    %v326 = vld [vmem:[#allocation10 + $0x8] sm:$0xff]
    %v327 = vld [vmem:[#allocation10 + $0x10] sm:$0xff]
    %v328 = vld [vmem:[#allocation10 + $0x18] sm:$0xff]
    %329 = vmatprep.subr.mxu0 0.0
    %330 = vmatpush1.msra.mxu0 0.0
    %331 = vmatprep.subr.mxu0 0.0
    %332 = vmatpush1.msra.mxu0 0.0
    %333 = vmatprep.subr.mxu0 0.0
    %334 = vmatpush1.msra.mxu0 0.0
    %335 = vmatprep.subr.mxu0 0.0
    %336 = vmatpush1.msra.mxu0 0.0
    %337 = vmatprep.subr.mxu0 0.0
    %338 = vmatpush1.msra.mxu0 0.0
    %339 = vmatprep.subr.mxu0 0.0
    %340 = vmatpush1.msra.mxu0 0.0
    %341 = vmatprep.subr.mxu0 0.0
    %342 = vmatpush1.msra.mxu0 0.0
    %343 = vmatprep.subr.mxu0 0.0
    %344 = vmatpush1.msra.mxu0 0.0
    %345 = vmatprep.subr.mxu0 0.0
    %346 = vmatpush1.msra.mxu0 0.0
    %347 = vmatprep.subr.mxu0 0.0
    %348 = vmatpush1.msra.mxu0 0.0
    %349 = vmatprep.subr.mxu0 0.0
    %350 = vmatpush1.msra.mxu0 0.0
    %351 = vmatprep.subr.mxu0 0.0
    %352 = vmatpush1.msra.mxu0 0.0
    %353 = vmatprep.subr.mxu0 0.0
    %354 = vmatpush1.msra.mxu0 %v328
    %355 = vmatprep.subr.mxu0 0.0
    %356 = vmatpush1.msra.mxu0 %v327
    %357 = vmatprep.subr.mxu0 0.0
    %358 = vmatpush1.msra.mxu0 %v326
    %359 = vmatprep.subr.mxu0 0.0
    %360 = vmatpush1.msra.mxu0 %v325
    %361 = vmatprep.subr.mxu0 0.0
    %362 = vmatpush2.msra.mxu0 0.0
    %363 = vmatprep.subr.mxu0 0.0
    %364 = vmatpush2.msra.mxu0 0.0
    %365 = vmatprep.subr.mxu0 0.0
    %366 = vmatpush2.msra.mxu0 0.0
    %367 = vmatprep.subr.mxu0 0.0
    %368 = vmatpush2.msra.mxu0 0.0
    %369 = vmatprep.subr.mxu0 0.0
    %370 = vmatpush2.msra.mxu0 0.0
    %371 = vmatprep.subr.mxu0 0.0
    %372 = vmatpush2.msra.mxu0 0.0
    %373 = vmatprep.subr.mxu0 0.0
    %374 = vmatpush2.msra.mxu0 0.0
    %375 = vmatprep.subr.mxu0 0.0
    %376 = vmatpush2.msra.mxu0 0.0
    %377 = vmatprep.subr.mxu0 0.0
    %378 = vmatpush2.msra.mxu0 0.0
    %379 = vmatprep.subr.mxu0 0.0
    %380 = vmatpush2.msra.mxu0 0.0
    %381 = vmatprep.subr.mxu0 0.0
    %382 = vmatpush2.msra.mxu0 0.0
    %383 = vmatprep.subr.mxu0 0.0
    %384 = vmatpush2.msra.mxu0 0.0
    %385 = vmatprep.subr.mxu0 0.0
    %386 = vmatpush2.msra.mxu0 0.0
    %387 = vmatprep.subr.mxu0 0.0
    %388 = vmatpush2.msra.mxu0 0.0
    %389 = vmatprep.subr.mxu0 0.0
    %390 = vmatpush2.msra.mxu0 0.0
    %391 = vmatprep.subr.mxu0 0.0
    %392 = vmatpush2.msra.mxu0 0.0
    %393 = vmatprep.mubr.f32.mxu0 0.0
    %394 = vmatmul.mubr.f32.gmra.mxu0 %v99
    %v395 = vpop.f32.mrf.mxu0
    %v396 = vadd.f32 0.0, %v395
    %v397 = vpop.f32.mrf.mxu0
    %398 = vdwg.mxu0
    %v401 = vsel %vm224, %v320, %v313
    %v402 = vsel %vm97, %v401, 0
    %404 = vmatprep.subr.mxu0 0.0
    %405 = vmatpush1.msra.mxu0 0.0
    %406 = vmatprep.subr.mxu0 0.0
    %407 = vmatpush1.msra.mxu0 0.0
    %408 = vmatprep.subr.mxu0 0.0
    %409 = vmatpush1.msra.mxu0 0.0
    %410 = vmatprep.subr.mxu0 0.0
    %411 = vmatpush1.msra.mxu0 0.0
    %412 = vmatprep.subr.mxu0 0.0
    %413 = vmatpush1.msra.mxu0 0.0
    %414 = vmatprep.subr.mxu0 0.0
    %415 = vmatpush1.msra.mxu0 0.0
    %416 = vmatprep.subr.mxu0 0.0
    %417 = vmatpush1.msra.mxu0 0.0
    %418 = vmatprep.subr.mxu0 0.0
    %419 = vmatpush1.msra.mxu0 0.0
    %420 = vmatprep.subr.mxu0 0.0
    %421 = vmatpush1.msra.mxu0 0.0
    %422 = vmatprep.subr.mxu0 0.0
    %423 = vmatpush1.msra.mxu0 0.0
    %424 = vmatprep.subr.mxu0 0.0
    %425 = vmatpush1.msra.mxu0 0.0
    %426 = vmatprep.subr.mxu0 0.0
    %427 = vmatpush1.msra.mxu0 0.0
    %428 = vmatprep.subr.mxu0 0.0
    %429 = vmatpush1.msra.mxu0 %v324
    %430 = vmatprep.subr.mxu0 0.0
    %431 = vmatpush1.msra.mxu0 %v323
    %432 = vmatprep.subr.mxu0 0.0
    %433 = vmatpush1.msra.mxu0 %v322
    %434 = vmatprep.subr.mxu0 0.0
    %435 = vmatpush1.msra.mxu0 %v321
    %436 = vmatprep.subr.mxu0 0.0
    %437 = vmatpush2.msra.mxu0 0.0
    %438 = vmatprep.subr.mxu0 0.0
    %439 = vmatpush2.msra.mxu0 0.0
    %440 = vmatprep.subr.mxu0 0.0
    %441 = vmatpush2.msra.mxu0 0.0
    %442 = vmatprep.subr.mxu0 0.0
    %443 = vmatpush2.msra.mxu0 0.0
    %444 = vmatprep.subr.mxu0 0.0
    %445 = vmatpush2.msra.mxu0 0.0
    %446 = vmatprep.subr.mxu0 0.0
    %447 = vmatpush2.msra.mxu0 0.0
    %448 = vmatprep.subr.mxu0 0.0
    %449 = vmatpush2.msra.mxu0 0.0
    %450 = vmatprep.subr.mxu0 0.0
    %451 = vmatpush2.msra.mxu0 0.0
    %452 = vmatprep.subr.mxu0 0.0
    %453 = vmatpush2.msra.mxu0 0.0
    %454 = vmatprep.subr.mxu0 0.0
    %455 = vmatpush2.msra.mxu0 0.0
    %456 = vmatprep.subr.mxu0 0.0
    %457 = vmatpush2.msra.mxu0 0.0
    %458 = vmatprep.subr.mxu0 0.0
    %459 = vmatpush2.msra.mxu0 0.0
    %460 = vmatprep.subr.mxu0 0.0
    %461 = vmatpush2.msra.mxu0 0.0
    %462 = vmatprep.subr.mxu0 0.0
    %463 = vmatpush2.msra.mxu0 0.0
    %464 = vmatprep.subr.mxu0 0.0
    %465 = vmatpush2.msra.mxu0 0.0
    %466 = vmatprep.subr.mxu0 0.0
    %467 = vmatpush2.msra.mxu0 0.0
    %468 = vmatprep.mubr.f32.mxu0 0.0
    %469 = vmatmul.mubr.f32.gmra.mxu0 %v402
    %v470 = vpop.f32.mrf.mxu0
    %v471 = vadd.f32 %v396, %v470
    %v472 = vpop.f32.mrf.mxu0
    %473 = vdwg.mxu0
    %v474 = vtanh.pop %v471
    %vm475 = vcmask 254976
    %476 = vst.msk [vmem:[#allocation11] sm:$0x3] %vm475, %v474
    // Predicated region
    $region42: #{tpu_custom_call.1} parent=1 // pred_check
      _
    $region43: #{tpu_custom_call.1} parent=1 // pred_check_branch
      %478 = sbr.rel (0) target = $region45
    $region44: #{tpu_custom_call.1} parent=1 // pred_region
      %s480 = ssub.s32 32, 32
      %481 = vsyncadd [#allocation4], %s480
      %s483 = sshll.u32 [#allocation11], 4
      %s484 = int_to_ptr.vmem [resolvable:$true] %s483
      %486 = dma.vmem_to_hbm [thread:$0]  %s484, 32, %s5, [#allocation4]
    $region45: #{tpu_custom_call.1} parent=1 // pred_fallthru
      _
    // Predicated region
    $region46: #{tpu_custom_call.1} parent=1 // pred_check
      _
    $region47: #{tpu_custom_call.1} parent=1 // pred_check_branch
      %488 = sbr.rel (0) target = $region49
    $region48: #{tpu_custom_call.1} parent=1 // pred_region
      %s490 = ssub.s32 32, 32
      %491 = vsyncadd [#allocation13], %s490
      %s493 = sshll.u32 [#allocation12], 4
      %s494 = int_to_ptr.vmem [resolvable:$true] %s493
      %496 = dma.vmem_to_hbm [thread:$0]  %s494, 32, %s6, [#allocation13]
    $region49: #{tpu_custom_call.1} parent=1 // pred_fallthru
      _
    // Predicated region
    $region50: #{tpu_custom_call.1} parent=1 // pred_check
      _
    $region51: #{tpu_custom_call.1} parent=1 // pred_check_branch
      %498 = sbr.rel (0) target = $region53
    $region52: #{tpu_custom_call.1} parent=1 // pred_region
      %499 = dma.done [#allocation4], 32
    $region53: #{tpu_custom_call.1} parent=1 // pred_fallthru
      _
    // Predicated region
    $region54: #{tpu_custom_call.1} parent=1 // pred_check
      _
    $region55: #{tpu_custom_call.1} parent=1 // pred_check_branch
      %501 = sbr.rel (0) target = $region57
    $region56: #{tpu_custom_call.1} parent=1 // pred_region
      %502 = dma.done [#allocation13], 32
    $region57: #{tpu_custom_call.1} parent=1 // pred_fallthru
      _
    %503 = vsyncpa [#allocation3], 1
    %504 = vsyncpa [#allocation6], 1
    %505 = vsyncpa [#allocation9], 1
    %506 = vsyncpa [#allocation4], 1
    %507 = vsyncpa [#allocation13], 1

</llo_original>
